<compile_context>
chip_gen: v7x
topology: tpu7x:2x2x1
jax: 0.10.0
libtpu: 0.0.40
codegen_flags: <defaults>
</compile_context>

<pallas_src>
import jax
import jax.numpy as jnp
from jax.experimental import pallas as pl
from jax.experimental.pallas import tpu as pltpu

IN_FEATURES = 256
OUT_FEATURES = 1


def _round_up(n, m):
    return ((n + m - 1) // m) * m


def linear_kernel(x_ref, w_ref, b_ref, o_ref):
    # x_ref: (tb, 256) VMEM, w_ref: (1, 256) VMEM, b_ref: (1,) SMEM, o_ref: (tb, 1)
    xw = x_ref[...] * w_ref[...]                        # VPU: (tb, 256), w broadcasts
    # Fold the two 128-lane halves with a VPU add first: halves the XLU lane-reduce
    # work (the busiest compute slot), keeping compute hidden under the x DMA even
    # at 8 MiB tiles.
    folded = xw[:, :128] + xw[:, 128:]                  # VPU: (tb, 128)
    acc = jnp.sum(folded, axis=-1, keepdims=True)       # XLU: (tb, 1) f32
    o_ref[...] = (acc + b_ref[0]).astype(o_ref.dtype)


def linear_forward(x, w, b, *, tb=8192):
    """x: (B, 256), w: (1, 256) (PyTorch layout), b: (1,)  ->  (B, 1) = x @ w.T + b."""
    B, K = x.shape
    assert K == IN_FEATURES
    assert w.shape == (OUT_FEATURES, IN_FEATURES)
    assert b.shape == (OUT_FEATURES,)

    # Sublane-aligned tile, capped by (rounded-up) B so small batches get a
    # single small block.  No padding of x: Pallas handles the partial final
    # block (over-reads x, masks the out-of-range output writes).
    tb_eff = min(tb, _round_up(B, 8))
    grid = (pl.cdiv(B, tb_eff),)

    # VMEM budget: 2 x-tile buffers dominate; add headroom, floor at 16 MiB,
    # cap at 48 MiB (portable: < v7x's 64 MiB/TC physical, > v5e's 16 MiB default
    # scoped limit so tb=8192 compiles there too).
    vmem_bytes = 2 * tb_eff * (IN_FEATURES + OUT_FEATURES) * 4 + (2 << 20)
    vmem_bytes = int(min(max(vmem_bytes, 16 << 20), 48 << 20))

    out = pl.pallas_call(
        linear_kernel,
        out_shape=jax.ShapeDtypeStruct((B, OUT_FEATURES), x.dtype),
        grid_spec=pltpu.PrefetchScalarGridSpec(
            num_scalar_prefetch=0,
            grid=grid,
            in_specs=[
                pl.BlockSpec((tb_eff, IN_FEATURES), lambda i: (i, 0)),
                pl.BlockSpec((OUT_FEATURES, IN_FEATURES), lambda i: (0, 0)),
                pl.BlockSpec(memory_space=pltpu.MemorySpace.SMEM),
            ],
            out_specs=pl.BlockSpec((tb_eff, OUT_FEATURES), lambda i: (i, 0)),
        ),
        compiler_params=pltpu.CompilerParams(
            # No-op on v5e/v6e (1 TC); shards the batch grid across v7x's 2 TCs.
            dimension_semantics=("parallel",),
            vmem_limit_bytes=vmem_bytes,
        ),
        cost_estimate=pl.CostEstimate(
            flops=2 * B * IN_FEATURES,
            transcendentals=0,
            bytes_accessed=B * IN_FEATURES * 4
            + B * OUT_FEATURES * 4
            + IN_FEATURES * 4
            + OUT_FEATURES * 4,
        ),
    )(x, w, b)
    return out


def init_params(key):
    # Mimic PyTorch nn.Linear default init: U(-1/sqrt(fan_in), 1/sqrt(fan_in)).
    # Weight kept in PyTorch layout (out_features, in_features) = (1, 256).
    kw, kb = jax.random.split(key)
    bound = 1.0 / (IN_FEATURES ** 0.5)
    w = jax.random.uniform(kw, (OUT_FEATURES, IN_FEATURES),
                           minval=-bound, maxval=bound, dtype=jnp.float32)
    b = jax.random.uniform(kb, (OUT_FEATURES,),
                           minval=-bound, maxval=bound, dtype=jnp.float32)
    return w, b


if __name__ == "__main__":
    key = jax.random.PRNGKey(0)
    kx, kp = jax.random.split(key)
    w, b = init_params(kp)

    def ref_fn(xv):
        return jnp.sum(xv * w, axis=-1, keepdims=True) + b[None, :]

    # 1) Small tile-aligned batch, single grid step.
    B = 8
    x = jax.random.normal(kx, (B, IN_FEATURES), dtype=jnp.float32)
    out = jax.block_until_ready(linear_forward(x, w, b))
    assert out.shape == (B, OUT_FEATURES)
    assert jnp.allclose(out, ref_fn(x), atol=1e-4, rtol=1e-4)

    # 2) Ragged batch with a small forced tile: grid=2 with a partial final block
    #    (exercises the no-pad cdiv path and output-write masking).
    B2 = 13
    x2 = jax.random.normal(jax.random.PRNGKey(1), (B2, IN_FEATURES), dtype=jnp.float32)
    out2 = jax.block_until_ready(linear_forward(x2, w, b, tb=8))
    assert out2.shape == (B2, OUT_FEATURES)
    assert jnp.allclose(out2, ref_fn(x2), atol=1e-4, rtol=1e-4)

    # 3) Ragged batch with the default (large) tile: single partial block.
    B3 = 20
    x3 = jax.random.normal(jax.random.PRNGKey(2), (B3, IN_FEATURES), dtype=jnp.float32)
    out3 = jax.block_until_ready(linear_forward(x3, w, b))
    assert out3.shape == (B3, OUT_FEATURES)
    assert jnp.allclose(out3, ref_fn(x3), atol=1e-4, rtol=1e-4)

    print("KERNEL_OK")
</pallas_src>

<mosaic_0001>
module attributes {stable_mosaic.version = 11 : i64} {
  func.func @linear_kernel(%arg0: i32, %arg1: memref<8x256xf32, #tpu.memory_space<vmem>>, %arg2: memref<1x256xf32, #tpu.memory_space<vmem>>, %arg3: memref<1xf32, #tpu.memory_space<smem>>, %arg4: memref<8x1xf32, #tpu.memory_space<vmem>>) attributes {dimension_semantics = [#tpu.dimension_semantics<parallel>], iteration_bounds = array<i64: 1>, scalar_prefetch = 0 : i64, scratch_operands = 0 : i64, tpu.core_type = #tpu.core_type<tc>, window_params = [{transform_indices = @transform_0, window_bounds = array<i64: 8, 256>}, {pipeline_mode = #tpu.pipeline_mode<synchronous>, transform_indices = @transform_1, window_bounds = array<i64: 1, 256>}, {transform_indices = @transform_2, window_bounds = array<i64: 1>}, {transform_indices = @transform_3, window_bounds = array<i64: 8, 1>}]} {
    %c0 = arith.constant 0 : index
    %c0_0 = arith.constant 0 : index
    %0 = vector.load %arg1[%c0, %c0_0] : memref<8x256xf32, #tpu.memory_space<vmem>>, vector<8x256xf32>
    %c0_1 = arith.constant 0 : index
    %c0_2 = arith.constant 0 : index
    %1 = vector.load %arg2[%c0_1, %c0_2] : memref<1x256xf32, #tpu.memory_space<vmem>>, vector<1x256xf32>
    %2 = vector.broadcast %1 : vector<1x256xf32> to vector<8x256xf32>
    %3 = arith.mulf %0, %2 : vector<8x256xf32>
    %4 = vector.extract_strided_slice %3 {offsets = [0, 0], sizes = [8, 128], strides = [1, 1]} : vector<8x256xf32> to vector<8x128xf32>
    %5 = vector.extract_strided_slice %3 {offsets = [0, 128], sizes = [8, 128], strides = [1, 1]} : vector<8x256xf32> to vector<8x128xf32>
    %6 = arith.addf %4, %5 : vector<8x128xf32>
    %cst = arith.constant dense<0.000000e+00> : vector<8xf32>
    %7 = vector.multi_reduction <add>, %6, %cst [1] : vector<8x128xf32> to vector<8xf32>
    %8 = vector.shape_cast %7 : vector<8xf32> to vector<8x1xf32>
    %c0_3 = arith.constant 0 : index
    %9 = memref.load %arg3[%c0_3] : memref<1xf32, #tpu.memory_space<smem>>
    %10 = vector.broadcast %9 : f32 to vector<8x1xf32>
    %11 = arith.addf %8, %10 : vector<8x1xf32>
    %c0_4 = arith.constant 0 : index
    %c0_5 = arith.constant 0 : index
    %12 = vector.load %arg4[%c0_4, %c0_5] : memref<8x1xf32, #tpu.memory_space<vmem>>, vector<8x1xf32>
    tpu.vector_store %arg4[%c0_4, %c0_5], %11 {strides = array<i32>} : memref<8x1xf32, #tpu.memory_space<vmem>>, vector<8x1xf32>,
    return
  }
  func.func @transform_0(%arg0: i32) -> (i32, i32) {
    %c0_i32 = arith.constant 0 : i32
    %c0_i32_0 = arith.constant 0 : i32
    return %arg0, %c0_i32 : i32, i32
  }
  func.func @transform_1(%arg0: i32) -> (i32, i32) {
    %c0_i32 = arith.constant 0 : i32
    %c0_i32_0 = arith.constant 0 : i32
    %c0_i32_1 = arith.constant 0 : i32
    return %c0_i32, %c0_i32_0 : i32, i32
  }
  func.func @transform_2(%arg0: i32) -> i32 {
    %c0_i32 = arith.constant 0 : i32
    %c0_i32_0 = arith.constant 0 : i32
    return %c0_i32 : i32
  }
  func.func @transform_3(%arg0: i32) -> (i32, i32) {
    %c0_i32 = arith.constant 0 : i32
    %c0_i32_0 = arith.constant 0 : i32
    return %arg0, %c0_i32 : i32, i32
  }
}

</mosaic_0001>

<llo_original>
// kernel: tpu_custom_call.1
$region0: #{tpu_custom_call.1}
  #allocation0 [shape = 'u32[]', space=smem, size = 0x4, offset = 0x4, fixed_abs, tag = 'smem constant byte address 0x4 - core index']
  #allocation1 [shape = 'u32[144,128]{1,0:T(1,128)}', space=vmem, size = 0x12000, scoped, tag = 'internal scratch']
  #allocation2 [shape = 'f32[1]{0:T(128)S(6)}', space=smem, size = 0x200, scoped, tag = 'scoped memory for tpu_custom_call.1']
  %s0 = inlined_call_operand.hbm [shape: f32[8,256], index: 0, kind: input, shape index: {}]
  %s1 = inlined_call_operand.vmem [shape: f32[1,256], index: 1, kind: input, shape index: {}]
  %s2 = inlined_call_operand.<no memory space> [shape: f32[1], index: 2, kind: input, shape index: {}]
  %s3 = inlined_call_operand.vmem [shape: f32[8,1], index: 3, kind: output, shape index: {}]
  %s4 = sld [smem:[#allocation0]]
  $region26: #{tpu_custom_call.1} parent=0
    _
  %s6 = ssub.s32 1, %s4
  %s7 = scalar_select 0, %s6, %s4
  %8 = sst [smem:[#allocation2]] %s2
  $region1: #{tpu_custom_call.1} parent=0
    #allocation3 [shape = 'u8[8192]{0}', space=vmem, size = 0x2000, scoped, tag = 'input window, operand 0, single buffered']
    #allocation4 [shape = 's32[1]{0}', space=sflag, size = 0x4, scoped, tag = 'scoped memory for tpu_custom_call.1']
    %9 = vsyncpa [#allocation4], 0
    // Predicated region
    $region2: #{tpu_custom_call.1} parent=1 // pred_check
      _
    $region3: #{tpu_custom_call.1} parent=1 // pred_check_branch
      %11 = sbr.rel (0) target = $region5
    $region4: #{tpu_custom_call.1} parent=1 // pred_region
      %s13 = ssub.s32 256, 256
      %14 = vsyncadd [#allocation4], %s13
      %s16 = sshll.u32 [#allocation3], 4
      %s17 = int_to_ptr.vmem [resolvable:$true] %s16
      %19 = dma.hbm_to_vmem [thread:$0]  %s0, 256, %s17, [#allocation4]
    $region5: #{tpu_custom_call.1} parent=1 // pred_fallthru
      _
    // Predicated region
    $region6: #{tpu_custom_call.1} parent=1 // pred_check
      _
    $region7: #{tpu_custom_call.1} parent=1 // pred_check_branch
      %21 = sbr.rel (0) target = $region9
    $region8: #{tpu_custom_call.1} parent=1 // pred_region
      _
    $region9: #{tpu_custom_call.1} parent=1 // pred_fallthru
      _
    // Predicated region
    $region10: #{tpu_custom_call.1} parent=1 // pred_check
      _
    $region11: #{tpu_custom_call.1} parent=1 // pred_check_branch
      %23 = sbr.rel (0) target = $region13
    $region12: #{tpu_custom_call.1} parent=1 // pred_region
      _
    $region13: #{tpu_custom_call.1} parent=1 // pred_fallthru
      _
    // Predicated region
    $region14: #{tpu_custom_call.1} parent=1 // pred_check
      _
    $region15: #{tpu_custom_call.1} parent=1 // pred_check_branch
      %25 = sbr.rel (0) target = $region17
    $region16: #{tpu_custom_call.1} parent=1 // pred_region
      %26 = dma.done [#allocation4], 256
    $region17: #{tpu_custom_call.1} parent=1 // pred_fallthru
      _
    %v27 = vld [vmem:[#allocation3] sm:$0xff]
    %v28 = vld [vmem:[#allocation3 + $0x8] sm:$0xff]
    %v29 = vld [vmem:[%s1] sm:$0x3]
    %v31 = vlaneseq
    %v32 = vshrl.u32 %v31, 7
    %v33 = vsub.s32 0, %v32
    %v34 = vrot.slane %v29, %v33
    %v35 = vlaneseq
    %v36 = vshrl.u32 %v35, 7
    %v37 = vsub.s32 1, %v36
    %v38 = vrot.slane %v29, %v37
    %v41 = vmul.f32 %v27, %v34
    %v42 = vmul.f32 %v28, %v38
    %v43 = vadd.f32 %v41, %v42
    %44 = vadd.xlane.f32.xlu0 %v43
    %v45 = vpop.xlane.xlu0 %44
    %s46 = sld [smem:[#allocation2]]
    %v47 = vstv %s46
    %v48 = vadd.f32 %v45, %v47
    %vm49 = vcmask 7168
    %50 = vst.msk [vmem:[%s3] sm:$0xff] %vm49, %v48
    // Predicated region
    $region18: #{tpu_custom_call.1} parent=1 // pred_check
      _
    $region19: #{tpu_custom_call.1} parent=1 // pred_check_branch
      %52 = sbr.rel (0) target = $region21
    $region20: #{tpu_custom_call.1} parent=1 // pred_region
      _
    $region21: #{tpu_custom_call.1} parent=1 // pred_fallthru
      _
    // Predicated region
    $region22: #{tpu_custom_call.1} parent=1 // pred_check
      _
    $region23: #{tpu_custom_call.1} parent=1 // pred_check_branch
      %54 = sbr.rel (0) target = $region25
    $region24: #{tpu_custom_call.1} parent=1 // pred_region
      _
    $region25: #{tpu_custom_call.1} parent=1 // pred_fallthru
      _
    %55 = vsyncpa [#allocation4], 1

</llo_original>
